<compile_context>
chip_gen: v5e
topology: v5e:2x2
jax: 0.10.0
libtpu: 0.0.40
codegen_flags: <defaults>
</compile_context>

<pallas_src>
import jax
import jax.numpy as jnp
from jax.experimental import pallas as pl
from jax.experimental.pallas import tpu as pltpu


# ----------------------------------------------------------------------------
# Path 1 (default): single HBM->HBM DMA copy.
# ----------------------------------------------------------------------------
def _dma_copy_kernel(x_ref, o_ref, sem):
    cp = pltpu.make_async_copy(x_ref, o_ref, sem)
    cp.start()
    cp.wait()


def _dma_identity(x: jax.Array) -> jax.Array:
    return pl.pallas_call(
        _dma_copy_kernel,
        out_shape=jax.ShapeDtypeStruct(x.shape, x.dtype),
        in_specs=[pl.BlockSpec(memory_space=pl.ANY)],
        out_specs=pl.BlockSpec(memory_space=pl.ANY),
        scratch_shapes=[pltpu.SemaphoreType.DMA(())],
    )(x)


# ----------------------------------------------------------------------------
# Path 2: tiled VMEM copy with large, dtype-aware blocks (auto-pipelined).
# ----------------------------------------------------------------------------
def _copy_tile_kernel(x_ref, o_ref):
    o_ref[...] = x_ref[...]


def _tiled_identity(x: jax.Array, *, tile_bytes: int = 4 * 1024 * 1024) -> jax.Array:
    orig_shape = x.shape
    if x.ndim == 0:
        x2d = x.reshape(1, 1)
    else:
        # Flatten so the last (lane) axis is preserved.
        x2d = x.reshape(-1, x.shape[-1])
    rows, cols = x2d.shape

    itemsize = x2d.dtype.itemsize
    # Dtype-aware minimum sublane tile: f32 -> 8, bf16/f16 -> 16, int8/fp8 -> 32.
    min_sublane = {4: 8, 2: 16, 1: 32}.get(itemsize, 8)

    # Lane-axis tile: lane-dense multiples of 128 when possible, otherwise the
    # full width (a full-extent block is always a legal block shape).
    if cols % 128 == 0 and cols > 0:
        col_tile = min(cols, 2048)
    else:
        col_tile = cols

    # Row-axis tile: as many rows as fit in ~tile_bytes per buffer, rounded to a
    # multiple of the dtype-min sublane count.  With default double buffering the
    # kernel holds ~4x tile_bytes (2 in + 2 out) of VMEM; vmem_limit_bytes below
    # gives headroom on every chip (v7x physical VMEM is 64 MiB/TC).
    rows_fit = max(min_sublane, tile_bytes // max(1, col_tile * itemsize))
    rows_fit = max(min_sublane, (rows_fit // min_sublane) * min_sublane)
    if rows <= rows_fit:
        row_tile = rows          # full extent: always legal
    else:
        row_tile = rows_fit      # multiple of min_sublane: legal; edge tile masked

    grid = (pl.cdiv(rows, row_tile), pl.cdiv(cols, col_tile))

    out2d = pl.pallas_call(
        _copy_tile_kernel,
        out_shape=jax.ShapeDtypeStruct((rows, cols), x2d.dtype),
        grid=grid,
        in_specs=[pl.BlockSpec((row_tile, col_tile), lambda i, j: (i, j))],
        out_specs=pl.BlockSpec((row_tile, col_tile), lambda i, j: (i, j)),
        compiler_params=pltpu.CompilerParams(
            dimension_semantics=("parallel", "parallel"),
            vmem_limit_bytes=32 * 1024 * 1024,
        ),
    )(x2d)

    return out2d.reshape(orig_shape)


# ----------------------------------------------------------------------------
# Public wrapper (the BaseModel "forward").
# ----------------------------------------------------------------------------
def base_model_forward(x: jax.Array, *, method: str = "dma") -> jax.Array:
    """Identity forward for BaseModel, run through a Pallas TPU kernel.

    method="dma"   : single HBM->HBM async copy (default, fastest).
    method="tiled" : tiled VMEM copy with large dtype-aware blocks.
    """
    if method == "dma":
        return _dma_identity(x)
    if method == "tiled":
        return _tiled_identity(x)
    raise ValueError(f"unknown method: {method}")


def num_trainable_params_millions() -> float:
    """Equivalent of BaseModel.summary(): BaseModel has no parameters."""
    return 0.0 / 1e6


if __name__ == "__main__":
    key = jax.random.PRNGKey(0)
    # Small NCHW input consistent with typical usage of the (abstract) module.
    x = jax.random.normal(key, (2, 4, 16, 16), dtype=jnp.float32)

    y_dma = jax.block_until_ready(base_model_forward(x, method="dma"))
    y_tiled = jax.block_until_ready(base_model_forward(x, method="tiled"))

    assert y_dma.shape == x.shape and y_dma.dtype == x.dtype
    assert y_tiled.shape == x.shape and y_tiled.dtype == x.dtype
    assert bool(jnp.array_equal(y_dma, x))
    assert bool(jnp.array_equal(y_tiled, x))

    # Exercise the dtype-aware tiling path on a sub-32-bit dtype as well.
    x_bf16 = x.astype(jnp.bfloat16)
    y_bf16 = jax.block_until_ready(base_model_forward(x_bf16, method="tiled"))
    assert y_bf16.dtype == jnp.bfloat16
    assert bool(jnp.array_equal(y_bf16, x_bf16))

    assert num_trainable_params_millions() == 0.0
    print("KERNEL_OK")
</pallas_src>

<mosaic_0001>
module attributes {stable_mosaic.version = 11 : i64} {
  func.func @_dma_copy_kernel(%arg0: memref<2x4x16x16xf32, #tpu.memory_space<any>>, %arg1: memref<2x4x16x16xf32, #tpu.memory_space<any>>, %arg2: memref<!tpu.dma_semaphore, #tpu.memory_space<semaphore_mem>>) attributes {dimension_semantics = [], scalar_prefetch = 0 : i64, scratch_operands = 1 : i64, tpu.core_type = #tpu.core_type<tc>} {
    tpu.enqueue_dma source(%arg0 : memref<2x4x16x16xf32, #tpu.memory_space<any>>) target(%arg1 : memref<2x4x16x16xf32, #tpu.memory_space<any>>) target_semaphore(%arg2 : memref<!tpu.dma_semaphore, #tpu.memory_space<semaphore_mem>>)
    tpu.wait_dma2 semaphore(%arg2 : memref<!tpu.dma_semaphore, #tpu.memory_space<semaphore_mem>>) src(%arg0 : memref<2x4x16x16xf32, #tpu.memory_space<any>>) dst(%arg1 : memref<2x4x16x16xf32, #tpu.memory_space<any>>)
    return
  }
}

</mosaic_0001>

<llo_original>
// kernel: tpu_custom_call.1
$region0: #{tpu_custom_call.1}
  #allocation0 [shape = 'u32[]', space=smem, size = 0x4, offset = 0x4, fixed_abs, tag = 'smem constant byte address 0x4 - core index']
  #allocation1 [shape = 'u32[72,128]{1,0:T(1,128)}', space=vmem, size = 0x9000, scoped, tag = 'internal scratch']
  #allocation2 [shape = 's32[1]{0}', space=sflag, size = 0x4, scoped, tag = 'scratch operand']
  #allocation3 [shape = 's32[]', space=sflag, size = 0x4, offset = 0, fixed_abs, tag = 'sflag constant byte address 0x0 - dummy sync flag']
  #allocation4 [shape = 'u32[0]{0}', space=smem, size = 0, offset = 0, fixed_abs, tag = 'smem constant byte address 0x0 - null']
  %s0 = inlined_call_operand.hbm [shape: f32[2,4,16,16], index: 0, kind: input, shape index: {}]
  %s1 = inlined_call_operand.hbm [shape: f32[2,4,16,16], index: 1, kind: output, shape index: {}]
  %s2 = sld [smem:[#allocation0]]
  $region2: #{tpu_custom_call.1} parent=0
    _
  %s4 = ssub.s32 1, %s2
  %s5 = scalar_select 0, %s4, %s2
  %s7 = sshll.u32 1, 14
  %s8 = sxor.u32 4294967295, %s7
  %s10 = sshll.u32 %s0, 4
  %s11 = int_to_ptr.hbm [resolvable:$true] %s10
  %s12 = sshll.u32 %s1, 4
  %s13 = int_to_ptr.hbm [resolvable:$true] %s12
  %16 = dma.general %s11, 2048, %s13, [#allocation2], [#allocation3], [#allocation4], 0, 0
  %s17 = smul.u32 2, 4
  %s18 = smul.u32 %s17, 16
  %s19 = smul.u32 %s18, 1
  %s20 = sshll.u32 %s19, 4
  %21 = dma.done [#allocation2], %s20
  %22 = vsyncmov [#allocation2]
  %s23 = vpop.sfrf %22
  %p24 = scmp.eq.s32.totalorder %s23, 0
  %p25 = pneg %p24
  %27 = shalt.err (%p25)

</llo_original>
